<compile_context>
chip_gen: v7x
topology: tpu7x:2x2x1
jax: 0.10.0
libtpu: 0.0.40
codegen_flags: <defaults>
</compile_context>

<pallas_src>
import functools

import jax
import jax.numpy as jnp
from jax.experimental import pallas as pl
from jax.experimental.pallas import tpu as pltpu


def _round_up(n, m):
    return ((n + m - 1) // m) * m


def _deep_fel_kernel(x_ref, w1_ref, b1_ref, w2_ref, b2_ref, w3_ref, ma_ref, out_ref):
    """One batch tile of the DeepFEL MLP.

    x_ref:  (TB, dim_ref)   activations (f32)
    w*_ref: per-layer weights, stored (in, out), in matmul dtype (f32 or bf16)
    b*_ref: (1, n) biases, f32
    ma_ref: (1, dim_act) max_act scale, f32
    out_ref:(TB, dim_act)
    """
    mm_dtype = w1_ref.dtype  # matmul operand dtype (f32 or bf16); acc stays f32

    x = x_ref[...].astype(mm_dtype)

    # Layer 1: Linear + ReLU (f32 accumulation + f32 elementwise)
    h1 = jnp.dot(x, w1_ref[...], preferred_element_type=jnp.float32) + b1_ref[...]
    h1 = jnp.maximum(h1, 0.0)

    # Layer 2: Linear + ReLU
    h2 = jnp.dot(h1.astype(mm_dtype), w2_ref[...],
                 preferred_element_type=jnp.float32) + b2_ref[...]
    h2 = jnp.maximum(h2, 0.0)

    # Output layer: Linear (no bias) + tanh, scaled by max_act.
    o = jnp.tanh(jnp.dot(h2.astype(mm_dtype), w3_ref[...],
                         preferred_element_type=jnp.float32)) * ma_ref[...]

    out_ref[...] = o.astype(out_ref.dtype)


def pack_deep_fel_params(w1, b1, w2, b2, w3, max_act, *,
                         matmul_dtype=jnp.float32, param_dtype=jnp.float32):
    """Pack DeepFEL parameters for the kernel. Call ONCE per parameter set
    (the result depends only on the parameters, so cache/reuse it)."""
    w1p = jnp.asarray(w1, dtype=matmul_dtype)                       # (dim_ref, u0)
    w2p = jnp.asarray(w2, dtype=matmul_dtype)                       # (u0, u1)
    w3p = jnp.asarray(w3, dtype=matmul_dtype)                       # (u1, dim_act)
    b1p = jnp.asarray(b1, dtype=param_dtype).reshape(1, -1)         # (1, u0)
    b2p = jnp.asarray(b2, dtype=param_dtype).reshape(1, -1)         # (1, u1)
    map_ = jnp.asarray(max_act, dtype=param_dtype).reshape(1, -1)   # (1, dim_act)
    return (w1p, b1p, w2p, b2p, w3p, map_)


def deep_fel_forward(x, packed_params, *, tile_b=512):
    """Batched DeepFEL forward.

    x:             (B, dim_ref) float32
    packed_params: output of pack_deep_fel_params (weights pre-transposed (in, out))
    Returns:       (B, dim_act) float32
    """
    w1p, b1p, w2p, b2p, w3p, map_ = packed_params
    B, dim_ref = x.shape
    u0 = w1p.shape[1]
    u1 = w2p.shape[1]
    dim_act = w3p.shape[1]
    out_dtype = x.dtype

    # Batch tile: large enough to amortize per-step overhead, but capped so the
    # grid has >= 2 steps when B allows (keeps both v7x TensorCores busy under
    # dimension_semantics=("parallel",)).  Always a multiple of 8 (sublanes).
    half_b = max(8, _round_up((B + 1) // 2, 8))
    tb = min(tile_b, half_b)
    B_pad = _round_up(B, tb)
    grid = (B_pad // tb,)

    if B_pad != B:
        x = jnp.pad(x, ((0, B_pad - B), (0, 0)))

    elem_bytes = jnp.dtype(out_dtype).itemsize
    w_bytes = sum(int(a.size) * jnp.dtype(a.dtype).itemsize
                  for a in (w1p, b1p, w2p, b2p, w3p, map_))
    cost = pl.CostEstimate(
        flops=2 * B_pad * (dim_ref * u0 + u0 * u1 + u1 * dim_act),
        transcendentals=B_pad * dim_act,
        bytes_accessed=B_pad * dim_ref * elem_bytes
        + B_pad * dim_act * elem_bytes
        + w_bytes,
    )

    out = pl.pallas_call(
        _deep_fel_kernel,
        out_shape=jax.ShapeDtypeStruct((B_pad, dim_act), out_dtype),
        grid=grid,
        in_specs=[
            # Activations: tiled over the batch axis, full (tiny) feature dim.
            pl.BlockSpec((tb, dim_ref), lambda i: (i, 0)),
            # Per-layer parameters: constant block index -> resident in VMEM
            # across all grid steps (loaded once).
            pl.BlockSpec(w1p.shape, lambda i: (0, 0)),
            pl.BlockSpec(b1p.shape, lambda i: (0, 0)),
            pl.BlockSpec(w2p.shape, lambda i: (0, 0)),
            pl.BlockSpec(b2p.shape, lambda i: (0, 0)),
            pl.BlockSpec(w3p.shape, lambda i: (0, 0)),
            pl.BlockSpec(map_.shape, lambda i: (0, 0)),
        ],
        out_specs=pl.BlockSpec((tb, dim_act), lambda i: (i, 0)),
        compiler_params=pltpu.CompilerParams(
            dimension_semantics=("parallel",),  # megacore sharding on v7x
        ),
        cost_estimate=cost,
    )(x, w1p, b1p, w2p, b2p, w3p, map_)

    # Strip batch padding (padded rows computed relu(b*) garbage; discarded here).
    return out[:B, :]


def deep_fel_reference(x, w1, b1, w2, b2, w3, max_act):
    """Pure-JAX reference for correctness checking (weights stored (in, out))."""
    h1 = jnp.maximum(x @ w1 + b1, 0.0)
    h2 = jnp.maximum(h1 @ w2 + b2, 0.0)
    return jnp.tanh(h2 @ w3) * max_act


if __name__ == "__main__":
    # Shapes consistent with DeepFEL(units=(32, 32), dim_ref=8, dim_act=4),
    # batched over many control-step evaluations (B=200 -> exercises batch
    # padding and a 2-step parallel grid).
    B = 200
    dim_ref = 8
    units = (32, 32)
    dim_act = 4

    key = jax.random.PRNGKey(0)
    k_x, k_w1, k_b1, k_w2, k_b2, k_w3, k_ma = jax.random.split(key, 7)

    x = jax.random.normal(k_x, (B, dim_ref), dtype=jnp.float32)

    # Deterministic synthetic parameters, stored pre-transposed: (in, out).
    w1 = jax.random.normal(k_w1, (dim_ref, units[0]), dtype=jnp.float32) * 0.1
    b1 = jax.random.normal(k_b1, (units[0],), dtype=jnp.float32) * 0.1
    w2 = jax.random.normal(k_w2, (units[0], units[1]), dtype=jnp.float32) * 0.1
    b2 = jax.random.normal(k_b2, (units[1],), dtype=jnp.float32) * 0.1
    w3 = jax.random.normal(k_w3, (units[1], dim_act), dtype=jnp.float32) * 0.1
    max_act = jnp.abs(jax.random.normal(k_ma, (dim_act,), dtype=jnp.float32)) + 0.5

    ref = deep_fel_reference(x, w1, b1, w2, b2, w3, max_act)

    fwd = jax.jit(deep_fel_forward)

    # f32 matmul path (exact; v5e-safe default).
    params_f32 = pack_deep_fel_params(w1, b1, w2, b2, w3, max_act,
                                      matmul_dtype=jnp.float32)
    out_f32 = jax.block_until_ready(fwd(x, params_f32))
    assert out_f32.shape == (B, dim_act)
    assert jnp.allclose(out_f32, ref, atol=1e-5, rtol=1e-5), "f32 mismatch vs reference"

    # bf16 matmul-operand path (v6e/v7x MXU fast path), f32 accumulation and
    # f32 elementwise -> looser tolerance.
    params_bf16 = pack_deep_fel_params(w1, b1, w2, b2, w3, max_act,
                                       matmul_dtype=jnp.bfloat16)
    out_bf16 = jax.block_until_ready(fwd(x, params_bf16))
    assert out_bf16.shape == (B, dim_act)
    assert jnp.allclose(out_bf16, ref, atol=5e-2, rtol=5e-2), "bf16 mismatch vs reference"

    print("KERNEL_OK")
</pallas_src>

<mosaic_0001>
module attributes {stable_mosaic.version = 11 : i64} {
  func.func @_deep_fel_kernel(%arg0: i32, %arg1: memref<104x8xf32, #tpu.memory_space<vmem>>, %arg2: memref<8x32xf32, #tpu.memory_space<vmem>>, %arg3: memref<1x32xf32, #tpu.memory_space<vmem>>, %arg4: memref<32x32xf32, #tpu.memory_space<vmem>>, %arg5: memref<1x32xf32, #tpu.memory_space<vmem>>, %arg6: memref<32x4xf32, #tpu.memory_space<vmem>>, %arg7: memref<1x4xf32, #tpu.memory_space<vmem>>, %arg8: memref<104x4xf32, #tpu.memory_space<vmem>>) attributes {dimension_semantics = [#tpu.dimension_semantics<parallel>], iteration_bounds = array<i64: 2>, scalar_prefetch = 0 : i64, scratch_operands = 0 : i64, tpu.core_type = #tpu.core_type<tc>, window_params = [{transform_indices = @transform_0, window_bounds = array<i64: 104, 8>}, {pipeline_mode = #tpu.pipeline_mode<synchronous>, transform_indices = @transform_1, window_bounds = array<i64: 8, 32>}, {pipeline_mode = #tpu.pipeline_mode<synchronous>, transform_indices = @transform_2, window_bounds = array<i64: 1, 32>}, {pipeline_mode = #tpu.pipeline_mode<synchronous>, transform_indices = @transform_3, window_bounds = array<i64: 32, 32>}, {pipeline_mode = #tpu.pipeline_mode<synchronous>, transform_indices = @transform_4, window_bounds = array<i64: 1, 32>}, {pipeline_mode = #tpu.pipeline_mode<synchronous>, transform_indices = @transform_5, window_bounds = array<i64: 32, 4>}, {pipeline_mode = #tpu.pipeline_mode<synchronous>, transform_indices = @transform_6, window_bounds = array<i64: 1, 4>}, {transform_indices = @transform_7, window_bounds = array<i64: 104, 4>}]} {
    %c0 = arith.constant 0 : index
    %c0_0 = arith.constant 0 : index
    %0 = vector.load %arg1[%c0, %c0_0] : memref<104x8xf32, #tpu.memory_space<vmem>>, vector<104x8xf32>
    %c0_1 = arith.constant 0 : index
    %c0_2 = arith.constant 0 : index
    %1 = vector.load %arg2[%c0_1, %c0_2] : memref<8x32xf32, #tpu.memory_space<vmem>>, vector<8x32xf32>
    %cst = arith.constant dense<0.000000e+00> : vector<104x32xf32>
    %2 = tpu.matmul %0, %1, %cst {dimension_numbers = #tpu.dot_dimension_numbers<[1], [0], [0], [1], [0, 0, 1, 1], [], []>} : vector<104x8xf32>, vector<8x32xf32>, vector<104x32xf32> -> vector<104x32xf32>
    %c0_3 = arith.constant 0 : index
    %c0_4 = arith.constant 0 : index
    %3 = vector.load %arg3[%c0_3, %c0_4] : memref<1x32xf32, #tpu.memory_space<vmem>>, vector<1x32xf32>
    %4 = vector.broadcast %3 : vector<1x32xf32> to vector<104x32xf32>
    %5 = arith.addf %2, %4 : vector<104x32xf32>
    %cst_5 = arith.constant 0.000000e+00 : f32
    %6 = vector.broadcast %cst_5 : f32 to vector<104x32xf32>
    %7 = arith.maximumf %5, %6 : vector<104x32xf32>
    %c0_6 = arith.constant 0 : index
    %c0_7 = arith.constant 0 : index
    %8 = vector.load %arg4[%c0_6, %c0_7] : memref<32x32xf32, #tpu.memory_space<vmem>>, vector<32x32xf32>
    %cst_8 = arith.constant dense<0.000000e+00> : vector<104x32xf32>
    %9 = tpu.matmul %7, %8, %cst_8 {dimension_numbers = #tpu.dot_dimension_numbers<[1], [0], [0], [1], [0, 0, 1, 1], [], []>} : vector<104x32xf32>, vector<32x32xf32>, vector<104x32xf32> -> vector<104x32xf32>
    %c0_9 = arith.constant 0 : index
    %c0_10 = arith.constant 0 : index
    %10 = vector.load %arg5[%c0_9, %c0_10] : memref<1x32xf32, #tpu.memory_space<vmem>>, vector<1x32xf32>
    %11 = vector.broadcast %10 : vector<1x32xf32> to vector<104x32xf32>
    %12 = arith.addf %9, %11 : vector<104x32xf32>
    %cst_11 = arith.constant 0.000000e+00 : f32
    %13 = vector.broadcast %cst_11 : f32 to vector<104x32xf32>
    %14 = arith.maximumf %12, %13 : vector<104x32xf32>
    %c0_12 = arith.constant 0 : index
    %c0_13 = arith.constant 0 : index
    %15 = vector.load %arg6[%c0_12, %c0_13] : memref<32x4xf32, #tpu.memory_space<vmem>>, vector<32x4xf32>
    %cst_14 = arith.constant dense<0.000000e+00> : vector<104x4xf32>
    %16 = tpu.matmul %14, %15, %cst_14 {dimension_numbers = #tpu.dot_dimension_numbers<[1], [0], [0], [1], [0, 0, 1, 1], [], []>} : vector<104x32xf32>, vector<32x4xf32>, vector<104x4xf32> -> vector<104x4xf32>
    %17 = math.tanh %16 : vector<104x4xf32>
    %c0_15 = arith.constant 0 : index
    %c0_16 = arith.constant 0 : index
    %18 = vector.load %arg7[%c0_15, %c0_16] : memref<1x4xf32, #tpu.memory_space<vmem>>, vector<1x4xf32>
    %19 = vector.broadcast %18 : vector<1x4xf32> to vector<104x4xf32>
    %20 = arith.mulf %17, %19 : vector<104x4xf32>
    %c0_17 = arith.constant 0 : index
    %c0_18 = arith.constant 0 : index
    %21 = vector.load %arg8[%c0_17, %c0_18] : memref<104x4xf32, #tpu.memory_space<vmem>>, vector<104x4xf32>
    tpu.vector_store %arg8[%c0_17, %c0_18], %20 {strides = array<i32>} : memref<104x4xf32, #tpu.memory_space<vmem>>, vector<104x4xf32>,
    return
  }
  func.func @transform_0(%arg0: i32) -> (i32, i32) {
    %c0_i32 = arith.constant 0 : i32
    %c0_i32_0 = arith.constant 0 : i32
    return %arg0, %c0_i32 : i32, i32
  }
  func.func @transform_1(%arg0: i32) -> (i32, i32) {
    %c0_i32 = arith.constant 0 : i32
    %c0_i32_0 = arith.constant 0 : i32
    %c0_i32_1 = arith.constant 0 : i32
    return %c0_i32, %c0_i32_0 : i32, i32
  }
  func.func @transform_2(%arg0: i32) -> (i32, i32) {
    %c0_i32 = arith.constant 0 : i32
    %c0_i32_0 = arith.constant 0 : i32
    %c0_i32_1 = arith.constant 0 : i32
    return %c0_i32, %c0_i32_0 : i32, i32
  }
  func.func @transform_3(%arg0: i32) -> (i32, i32) {
    %c0_i32 = arith.constant 0 : i32
    %c0_i32_0 = arith.constant 0 : i32
    %c0_i32_1 = arith.constant 0 : i32
    return %c0_i32, %c0_i32_0 : i32, i32
  }
  func.func @transform_4(%arg0: i32) -> (i32, i32) {
    %c0_i32 = arith.constant 0 : i32
    %c0_i32_0 = arith.constant 0 : i32
    %c0_i32_1 = arith.constant 0 : i32
    return %c0_i32, %c0_i32_0 : i32, i32
  }
  func.func @transform_5(%arg0: i32) -> (i32, i32) {
    %c0_i32 = arith.constant 0 : i32
    %c0_i32_0 = arith.constant 0 : i32
    %c0_i32_1 = arith.constant 0 : i32
    return %c0_i32, %c0_i32_0 : i32, i32
  }
  func.func @transform_6(%arg0: i32) -> (i32, i32) {
    %c0_i32 = arith.constant 0 : i32
    %c0_i32_0 = arith.constant 0 : i32
    %c0_i32_1 = arith.constant 0 : i32
    return %c0_i32, %c0_i32_0 : i32, i32
  }
  func.func @transform_7(%arg0: i32) -> (i32, i32) {
    %c0_i32 = arith.constant 0 : i32
    %c0_i32_0 = arith.constant 0 : i32
    return %arg0, %c0_i32 : i32, i32
  }
}

</mosaic_0001>

<llo_original>
// kernel: deep_fel_forward.1
$region0: #{deep_fel_forward.1}
  #allocation0 [shape = 'u32[]', space=smem, size = 0x4, offset = 0x4, fixed_abs, tag = 'smem constant byte address 0x4 - core index']
  #allocation1 [shape = 'u32[144,128]{1,0:T(1,128)}', space=vmem, size = 0x12000, scoped, tag = 'internal scratch']
  %s0 = inlined_call_operand.vmem [shape: f32[208,8], index: 0, kind: input, shape index: {}]
  %s1 = inlined_call_operand.vmem [shape: f32[8,32], index: 1, kind: input, shape index: {}]
  %s2 = inlined_call_operand.vmem [shape: f32[1,32], index: 2, kind: input, shape index: {}]
  %s3 = inlined_call_operand.vmem [shape: f32[32,32], index: 3, kind: input, shape index: {}]
  %s4 = inlined_call_operand.vmem [shape: f32[1,32], index: 4, kind: input, shape index: {}]
  %s5 = inlined_call_operand.vmem [shape: f32[32,4], index: 5, kind: input, shape index: {}]
  %s6 = inlined_call_operand.vmem [shape: f32[1,4], index: 6, kind: input, shape index: {}]
  %s7 = inlined_call_operand.vmem [shape: f32[208,4], index: 7, kind: output, shape index: {}]
  %s8 = sld [smem:[#allocation0]]
  $region61: #{deep_fel_forward.1} parent=0
    _
  %s10 = ssub.s32 1, %s8
  %s11 = scalar_select 0, %s10, %s8
  loop: start=0, step=1, limit=4
  $region2: #{deep_fel_forward.1} parent=0 // loop_pre_header
    _
  $region3: #{deep_fel_forward.1} parent=0 // loop_header
    %s13 = sphi 0, %s17
    %p14 = scmp.ge.s32.totalorder %s13, 4
    %s23 = sphi 0, %s25
    %s26 = sphi 0, %s23
    %s27 = sphi 0, %s26
    %s43 = sphi 0, %s27
    %s47 = sphi 0, %s47
    %s49 = sphi 0, %s47
    %s50 = sphi 0, %s49
    %s64 = sphi 0, %s50
    %s68 = sphi 0, %s68
    %s70 = sphi 0, %s68
    %s71 = sphi 0, %s70
    %s85 = sphi 0, %s71
    %s89 = sphi 0, %s89
    %s91 = sphi 0, %s89
    %s92 = sphi 0, %s91
    %s106 = sphi 0, %s92
    %s110 = sphi 0, %s110
    %s112 = sphi 0, %s110
    %s113 = sphi 0, %s112
    %s127 = sphi 0, %s113
    %s131 = sphi 0, %s131
    %s133 = sphi 0, %s131
    %s134 = sphi 0, %s133
    %s148 = sphi 0, %s134
    %s152 = sphi 0, %s152
    %s154 = sphi 0, %s152
    %s155 = sphi 0, %s154
    %s169 = sphi 0, %s155
    %s175 = sphi 0, %s177
    %s178 = sphi 0, %s175
    %s179 = sphi 0, %s178
    %s195 = sphi 0, %s179
  $region4: #{deep_fel_forward.1} parent=0 // loop_header_branch
    %16 = sbr.rel (%p14) target = $region8
  $region5: #{deep_fel_forward.1} parent=0 // loop_body
    %s18 = ssub.s32 %s13, 1
    %s19 = ssub.s32 %s13, 2
    %s20 = sadd.s32 %s13, 1
    %s21 = ssub.s32 %s13, %s20
    %p22 = scmp.eq.s32.totalorder %s21, 0
    %s24 = sadd.s32 %s23, 1
    %s25 = scalar_select %p22, %s23, %s24
    %p28 = pneg %p22
    %p29 = scmp.eq.s32.totalorder %s13, 1
    %p30 = por %p28, %p29
    %p31 = scmp.ne.s32.totalorder %s23, %s26
    %p32 = scmp.eq.s32.totalorder %s13, 0
    %p33 = por %p31, %p32
    %p34 = scmp.ne.s32.totalorder %s23, %s26
    %p35 = scmp.eq.s32.totalorder %s18, 1
    %p36 = por %p34, %p35
    %p37 = scmp.ne.s32.totalorder %s26, %s27
    %p38 = scmp.eq.s32.totalorder %s18, 0
    %p39 = por %p37, %p38
    %p40 = scmp.ne.s32.totalorder %s26, %s27
    %p41 = scmp.eq.s32.totalorder %s19, 1
    %p42 = por %p40, %p41
    %p44 = scmp.ne.s32.totalorder %s27, %s43
    %p45 = scmp.eq.s32.totalorder %s19, 0
    %p46 = por %p44, %p45
    %s48 = sadd.s32 %s47, 1
    %p51 = scmp.eq.s32.totalorder %s13, 1
    %p52 = scmp.ne.s32.totalorder %s47, %s49
    %p53 = scmp.eq.s32.totalorder %s13, 0
    %p54 = por %p52, %p53
    %p55 = scmp.ne.s32.totalorder %s47, %s49
    %p56 = scmp.eq.s32.totalorder %s18, 1
    %p57 = por %p55, %p56
    %p58 = scmp.ne.s32.totalorder %s49, %s50
    %p59 = scmp.eq.s32.totalorder %s18, 0
    %p60 = por %p58, %p59
    %p61 = scmp.ne.s32.totalorder %s49, %s50
    %p62 = scmp.eq.s32.totalorder %s19, 1
    %p63 = por %p61, %p62
    %p65 = scmp.ne.s32.totalorder %s50, %s64
    %p66 = scmp.eq.s32.totalorder %s19, 0
    %p67 = por %p65, %p66
    %s69 = sadd.s32 %s68, 1
    %p72 = scmp.eq.s32.totalorder %s13, 1
    %p73 = scmp.ne.s32.totalorder %s68, %s70
    %p74 = scmp.eq.s32.totalorder %s13, 0
    %p75 = por %p73, %p74
    %p76 = scmp.ne.s32.totalorder %s68, %s70
    %p77 = scmp.eq.s32.totalorder %s18, 1
    %p78 = por %p76, %p77
    %p79 = scmp.ne.s32.totalorder %s70, %s71
    %p80 = scmp.eq.s32.totalorder %s18, 0
    %p81 = por %p79, %p80
    %p82 = scmp.ne.s32.totalorder %s70, %s71
    %p83 = scmp.eq.s32.totalorder %s19, 1
    %p84 = por %p82, %p83
    %p86 = scmp.ne.s32.totalorder %s71, %s85
    %p87 = scmp.eq.s32.totalorder %s19, 0
    %p88 = por %p86, %p87
    %s90 = sadd.s32 %s89, 1
    %p93 = scmp.eq.s32.totalorder %s13, 1
    %p94 = scmp.ne.s32.totalorder %s89, %s91
    %p95 = scmp.eq.s32.totalorder %s13, 0
    %p96 = por %p94, %p95
    %p97 = scmp.ne.s32.totalorder %s89, %s91
    %p98 = scmp.eq.s32.totalorder %s18, 1
    %p99 = por %p97, %p98
    %p100 = scmp.ne.s32.totalorder %s91, %s92
    %p101 = scmp.eq.s32.totalorder %s18, 0
    %p102 = por %p100, %p101
    %p103 = scmp.ne.s32.totalorder %s91, %s92
    %p104 = scmp.eq.s32.totalorder %s19, 1
    %p105 = por %p103, %p104
    %p107 = scmp.ne.s32.totalorder %s92, %s106
    %p108 = scmp.eq.s32.totalorder %s19, 0
    %p109 = por %p107, %p108
    %s111 = sadd.s32 %s110, 1
    %p114 = scmp.eq.s32.totalorder %s13, 1
    %p115 = scmp.ne.s32.totalorder %s110, %s112
    %p116 = scmp.eq.s32.totalorder %s13, 0
    %p117 = por %p115, %p116
    %p118 = scmp.ne.s32.totalorder %s110, %s112
    %p119 = scmp.eq.s32.totalorder %s18, 1
    %p120 = por %p118, %p119
    %p121 = scmp.ne.s32.totalorder %s112, %s113
    %p122 = scmp.eq.s32.totalorder %s18, 0
    %p123 = por %p121, %p122
    %p124 = scmp.ne.s32.totalorder %s112, %s113
    %p125 = scmp.eq.s32.totalorder %s19, 1
    %p126 = por %p124, %p125
    %p128 = scmp.ne.s32.totalorder %s113, %s127
    %p129 = scmp.eq.s32.totalorder %s19, 0
    %p130 = por %p128, %p129
    %s132 = sadd.s32 %s131, 1
    %p135 = scmp.eq.s32.totalorder %s13, 1
    %p136 = scmp.ne.s32.totalorder %s131, %s133
    %p137 = scmp.eq.s32.totalorder %s13, 0
    %p138 = por %p136, %p137
    %p139 = scmp.ne.s32.totalorder %s131, %s133
    %p140 = scmp.eq.s32.totalorder %s18, 1
    %p141 = por %p139, %p140
    %p142 = scmp.ne.s32.totalorder %s133, %s134
    %p143 = scmp.eq.s32.totalorder %s18, 0
    %p144 = por %p142, %p143
    %p145 = scmp.ne.s32.totalorder %s133, %s134
    %p146 = scmp.eq.s32.totalorder %s19, 1
    %p147 = por %p145, %p146
    %p149 = scmp.ne.s32.totalorder %s134, %s148
    %p150 = scmp.eq.s32.totalorder %s19, 0
    %p151 = por %p149, %p150
    %s153 = sadd.s32 %s152, 1
    %p156 = scmp.eq.s32.totalorder %s13, 1
    %p157 = scmp.ne.s32.totalorder %s152, %s154
    %p158 = scmp.eq.s32.totalorder %s13, 0
    %p159 = por %p157, %p158
    %p160 = scmp.ne.s32.totalorder %s152, %s154
    %p161 = scmp.eq.s32.totalorder %s18, 1
    %p162 = por %p160, %p161
    %p163 = scmp.ne.s32.totalorder %s154, %s155
    %p164 = scmp.eq.s32.totalorder %s18, 0
    %p165 = por %p163, %p164
    %p166 = scmp.ne.s32.totalorder %s154, %s155
    %p167 = scmp.eq.s32.totalorder %s19, 1
    %p168 = por %p166, %p167
    %p170 = scmp.ne.s32.totalorder %s155, %s169
    %p171 = scmp.eq.s32.totalorder %s19, 0
    %p172 = por %p170, %p171
    %s173 = ssub.s32 %s13, %s20
    %p174 = scmp.eq.s32.totalorder %s173, 0
    %s176 = sadd.s32 %s175, 1
    %s177 = scalar_select %p174, %s175, %s176
    %p180 = pneg %p174
    %p181 = scmp.eq.s32.totalorder %s13, 1
    %p182 = por %p180, %p181
    %p183 = scmp.ne.s32.totalorder %s175, %s178
    %p184 = scmp.eq.s32.totalorder %s13, 0
    %p185 = por %p183, %p184
    %p186 = scmp.ne.s32.totalorder %s175, %s178
    %p187 = scmp.eq.s32.totalorder %s18, 1
    %p188 = por %p186, %p187
    %p189 = scmp.ne.s32.totalorder %s178, %s179
    %p190 = scmp.eq.s32.totalorder %s18, 0
    %p191 = por %p189, %p190
    %p192 = scmp.ne.s32.totalorder %s178, %s179
    %p193 = scmp.eq.s32.totalorder %s19, 1
    %p194 = por %p192, %p193
    %p196 = scmp.ne.s32.totalorder %s179, %s195
    %p197 = scmp.eq.s32.totalorder %s19, 0
    %p198 = por %p196, %p197
    %p199 = scmp.le.s32.totalorder 1, %s13
    %p200 = scmp.lt.s32.totalorder %s13, 3
    %p201 = pnand %p199, %p200
    %p202 = pneg %p201
    // Predicated region
    $region9: #{deep_fel_forward.1} parent=5 // pred_check
      _
    $region10: #{deep_fel_forward.1} parent=5 // pred_check_branch
      %204 = sbr.rel (%p201) target = $region12
    $region11: #{deep_fel_forward.1} parent=5 // pred_region
      %s205 = ssub.s32 %s13, 1
      // Predicated region
      $region13: #{deep_fel_forward.1} parent=11 // pred_check
        %p206 = pneg %p60
      $region14: #{deep_fel_forward.1} parent=11 // pred_check_branch
        %208 = sbr.rel (%p206) target = $region16
      $region15: #{deep_fel_forward.1} parent=11 // pred_region
        _
      $region16: #{deep_fel_forward.1} parent=11 // pred_fallthru
        _
      // Predicated region
      $region17: #{deep_fel_forward.1} parent=11 // pred_check
        %p209 = pneg %p81
      $region18: #{deep_fel_forward.1} parent=11 // pred_check_branch
        %211 = sbr.rel (%p209) target = $region20
      $region19: #{deep_fel_forward.1} parent=11 // pred_region
        _
      $region20: #{deep_fel_forward.1} parent=11 // pred_fallthru
        _
      // Predicated region
      $region21: #{deep_fel_forward.1} parent=11 // pred_check
        %p212 = pneg %p102
      $region22: #{deep_fel_forward.1} parent=11 // pred_check_branch
        %214 = sbr.rel (%p212) target = $region24
      $region23: #{deep_fel_forward.1} parent=11 // pred_region
        _
      $region24: #{deep_fel_forward.1} parent=11 // pred_fallthru
        _
      // Predicated region
      $region25: #{deep_fel_forward.1} parent=11 // pred_check
        %p215 = pneg %p123
      $region26: #{deep_fel_forward.1} parent=11 // pred_check_branch
        %217 = sbr.rel (%p215) target = $region28
      $region27: #{deep_fel_forward.1} parent=11 // pred_region
        _
      $region28: #{deep_fel_forward.1} parent=11 // pred_fallthru
        _
      // Predicated region
      $region29: #{deep_fel_forward.1} parent=11 // pred_check
        %p218 = pneg %p144
      $region30: #{deep_fel_forward.1} parent=11 // pred_check_branch
        %220 = sbr.rel (%p218) target = $region32
      $region31: #{deep_fel_forward.1} parent=11 // pred_region
        _
      $region32: #{deep_fel_forward.1} parent=11 // pred_fallthru
        _
      // Predicated region
      $region33: #{deep_fel_forward.1} parent=11 // pred_check
        %p221 = pneg %p165
      $region34: #{deep_fel_forward.1} parent=11 // pred_check_branch
        %223 = sbr.rel (%p221) target = $region36
      $region35: #{deep_fel_forward.1} parent=11 // pred_region
        _
      $region36: #{deep_fel_forward.1} parent=11 // pred_fallthru
        _
    $region12: #{deep_fel_forward.1} parent=5 // pred_fallthru
      _
    %p224 = scmp.lt.s32.totalorder %s13, 2
    // Predicated region
    $region37: #{deep_fel_forward.1} parent=5 // pred_check
      %p225 = pneg %p224
    $region38: #{deep_fel_forward.1} parent=5 // pred_check_branch
      %227 = sbr.rel (%p225) target = $region40
    $region39: #{deep_fel_forward.1} parent=5 // pred_region
      // Predicated region
      $region41: #{deep_fel_forward.1} parent=39 // pred_check
        %p228 = pneg %p33
      $region42: #{deep_fel_forward.1} parent=39 // pred_check_branch
        %230 = sbr.rel (%p228) target = $region44
      $region43: #{deep_fel_forward.1} parent=39 // pred_region
        %s231 = smul.u32 13, %s13
        %p232 = scmp.lt.s32.totalorder %s231, 25
        %s233 = scalar_select %p232, %s231, 25
        %s234 = smul.addr %s233, 8
        %s235 = scalar_lea.vmem %s0, %s234
        %s236 = smul.u32 13, %s13
      $region44: #{deep_fel_forward.1} parent=39 // pred_fallthru
        _
    $region40: #{deep_fel_forward.1} parent=5 // pred_fallthru
      _
    %p237 = scmp.le.s32.totalorder 1, %s13
    %p238 = scmp.lt.s32.totalorder %s13, 3
    %p239 = pnand %p237, %p238
    %p240 = pneg %p239
    // Predicated region
    $region45: #{deep_fel_forward.1} parent=5 // pred_check
      _
    $region46: #{deep_fel_forward.1} parent=5 // pred_check_branch
      %242 = sbr.rel (%p239) target = $region48
    $region47: #{deep_fel_forward.1} parent=5 // pred_region
      %s243 = ssub.s32 %s13, 1
      %s244 = smul.u32 13, %s18
      %p245 = scmp.lt.s32.totalorder %s244, 25
      %s246 = scalar_select %p245, %s244, 25
      %s247 = smul.addr %s246, 8
      %s248 = scalar_lea.vmem %s0, %s247
      %p249 = pneg %p39
      %p250 = pneg %p36
      %p251 = pneg %p60
      %p252 = pneg %p57
      %p253 = pneg %p81
      %p254 = pneg %p78
      %p255 = pneg %p102
      %p256 = pneg %p99
      %p257 = pneg %p123
      %p258 = pneg %p120
      %p259 = pneg %p144
      %p260 = pneg %p141
      %p261 = pneg %p165
      %p262 = pneg %p162
      %p263 = pneg %p191
      %p264 = pneg %p188
      %s265 = smul.u32 13, %s18
      %p266 = scmp.lt.s32.totalorder %s265, 25
      %s267 = scalar_select %p266, %s265, 25
      %s268 = smul.addr %s267, 8
      %s269 = scalar_lea.vmem %s7, %s268
      %s270 = smul.u32 13, %s18
      %p271 = scmp.lt.s32.totalorder %s270, 25
      %s272 = scalar_select %p271, %s270, 25
      %s273 = smul.addr %s272, 8
      %s274 = scalar_lea.vmem %s0, %s273
      %s275 = smul.u32 13, %s18
      %s276 = smul.u32 13, %s18
      %p277 = scmp.lt.s32.totalorder %s276, 25
      %s278 = scalar_select %p277, %s276, 25
      %s279 = smul.addr %s278, 8
      %s280 = scalar_lea.vmem %s7, %s279
      %s281 = smul.u32 13, %s18
      %v282 = vld [vmem:[%s274] sm:$0xff]
      %v283 = vld [vmem:[%s274 + $0x8] sm:$0xff]
      %v284 = vld [vmem:[%s274 + $0x10] sm:$0xff]
      %v285 = vld [vmem:[%s274 + $0x18] sm:$0xff]
      %v286 = vld [vmem:[%s274 + $0x20] sm:$0xff]
      %v287 = vld [vmem:[%s274 + $0x28] sm:$0xff]
      %v288 = vld [vmem:[%s274 + $0x30] sm:$0xff]
      %v289 = vld [vmem:[%s274 + $0x38] sm:$0xff]
      %v290 = vld [vmem:[%s274 + $0x40] sm:$0xff]
      %v291 = vld [vmem:[%s274 + $0x48] sm:$0xff]
      %v292 = vld [vmem:[%s274 + $0x50] sm:$0xff]
      %v293 = vld [vmem:[%s274 + $0x58] sm:$0xff]
      %v294 = vld [vmem:[%s274 + $0x60] sm:$0xff]
      %v295 = vld [vmem:[%s1] sm:$0xff]
      %v296 = vld [vmem:[%s2] sm:$0x1]
      %v298 = vlaneseq
      %v299 = vshrl.u32 %v298, 7
      %v300 = vsub.s32 0, %v299
      %v301 = vrot.slane %v296, %v300
      %vm303 = vcmask 64512
      %v305 = vsel %vm303, %v282, 0
      %v308 = vsel %vm303, %v283, 0
      %v311 = vsel %vm303, %v284, 0
      %v314 = vsel %vm303, %v285, 0
      %v317 = vsel %vm303, %v286, 0
      %v320 = vsel %vm303, %v287, 0
      %v323 = vsel %vm303, %v288, 0
      %v326 = vsel %vm303, %v289, 0
      %v329 = vsel %vm303, %v290, 0
      %v332 = vsel %vm303, %v291, 0
      %v335 = vsel %vm303, %v292, 0
      %v338 = vsel %vm303, %v293, 0
      %v341 = vsel %vm303, %v294, 0
      %343 = vmatprep.subr.mxu0 0.0
      %344 = vmatpush1.msra.mxu0 %v295
      %345 = vmatprep.subr.mxu0 0.0
      %346 = vmatpush1.msra.mxu0 0.0
      %347 = vmatprep.subr.mxu0 0.0
      %348 = vmatpush1.msra.mxu0 0.0
      %349 = vmatprep.subr.mxu0 0.0
      %350 = vmatpush1.msra.mxu0 0.0
      %351 = vmatprep.subr.mxu0 0.0
      %352 = vmatpush1.msra.mxu0 0.0
      %353 = vmatprep.subr.mxu0 0.0
      %354 = vmatpush1.msra.mxu0 0.0
      %355 = vmatprep.subr.mxu0 0.0
      %356 = vmatpush1.msra.mxu0 0.0
      %357 = vmatprep.subr.mxu0 0.0
      %358 = vmatpush1.msra.mxu0 0.0
      %359 = vmatprep.subr.mxu0 0.0
      %360 = vmatpush1.msra.mxu0 0.0
      %361 = vmatprep.subr.mxu0 0.0
      %362 = vmatpush1.msra.mxu0 0.0
      %363 = vmatprep.subr.mxu0 0.0
      %364 = vmatpush1.msra.mxu0 0.0
      %365 = vmatprep.subr.mxu0 0.0
      %366 = vmatpush1.msra.mxu0 0.0
      %367 = vmatprep.subr.mxu0 0.0
      %368 = vmatpush1.msra.mxu0 0.0
      %369 = vmatprep.subr.mxu0 0.0
      %370 = vmatpush1.msra.mxu0 0.0
      %371 = vmatprep.subr.mxu0 0.0
      %372 = vmatpush1.msra.mxu0 0.0
      %373 = vmatprep.subr.mxu0 0.0
      %374 = vmatpush1.msra.mxu0 0.0
      %375 = vmatprep.subr.mxu0 0.0
      %376 = vmatpush1.msra.mxu0 0.0
      %377 = vmatprep.subr.mxu0 0.0
      %378 = vmatpush1.msra.mxu0 0.0
      %379 = vmatprep.subr.mxu0 0.0
      %380 = vmatpush1.msra.mxu0 0.0
      %381 = vmatprep.subr.mxu0 0.0
      %382 = vmatpush1.msra.mxu0 0.0
      %383 = vmatprep.subr.mxu0 0.0
      %384 = vmatpush1.msra.mxu0 0.0
      %385 = vmatprep.subr.mxu0 0.0
      %386 = vmatpush1.msra.mxu0 0.0
      %387 = vmatprep.subr.mxu0 0.0
      %388 = vmatpush1.msra.mxu0 0.0
      %389 = vmatprep.subr.mxu0 0.0
      %390 = vmatpush1.msra.mxu0 0.0
      %391 = vmatprep.subr.mxu0 0.0
      %392 = vmatpush1.msra.mxu0 0.0
      %393 = vmatprep.subr.mxu0 0.0
      %394 = vmatpush1.msra.mxu0 0.0
      %395 = vmatprep.subr.mxu0 0.0
      %396 = vmatpush1.msra.mxu0 0.0
      %397 = vmatprep.subr.mxu0 0.0
      %398 = vmatpush1.msra.mxu0 0.0
      %399 = vmatprep.subr.mxu0 0.0
      %400 = vmatpush1.msra.mxu0 0.0
      %401 = vmatprep.subr.mxu0 0.0
      %402 = vmatpush1.msra.mxu0 0.0
      %403 = vmatprep.subr.mxu0 0.0
      %404 = vmatpush1.msra.mxu0 0.0
      %405 = vmatprep.subr.mxu0 0.0
      %406 = vmatpush1.msra.mxu0 0.0
      %407 = vmatprep.mubr.f32.mxu0 0.0
      %408 = vmatmul.mubr.f32.gmra.mrb[0].mxu0 %v305
      %v409 = vpop.f32.mrb[0].mxu0
      %v410 = vadd.f32 %v301, %v409
      %v411 = vpop.f32.mrb[0].mxu0
      %412 = vmatprep.mubr.f32.mxu0 0.0
      %413 = vmatmul.mubr.f32.gmra.mrb[0].mxu0 %v308
      %v414 = vpop.f32.mrb[0].mxu0
      %v415 = vadd.f32 %v301, %v414
      %v416 = vpop.f32.mrb[0].mxu0
      %417 = vmatprep.mubr.f32.mxu0 0.0
      %418 = vmatmul.mubr.f32.gmra.mrb[0].mxu0 %v311
      %v419 = vpop.f32.mrb[0].mxu0
      %v420 = vadd.f32 %v301, %v419
      %v421 = vpop.f32.mrb[0].mxu0
      %422 = vmatprep.mubr.f32.mxu0 0.0
      %423 = vmatmul.mubr.f32.gmra.mrb[0].mxu0 %v314
      %v424 = vpop.f32.mrb[0].mxu0
      %v425 = vadd.f32 %v301, %v424
      %v426 = vpop.f32.mrb[0].mxu0
      %427 = vmatprep.mubr.f32.mxu0 0.0
      %428 = vmatmul.mubr.f32.gmra.mrb[0].mxu0 %v317
      %v429 = vpop.f32.mrb[0].mxu0
      %v430 = vadd.f32 %v301, %v429
      %v431 = vpop.f32.mrb[0].mxu0
      %432 = vmatprep.mubr.f32.mxu0 0.0
      %433 = vmatmul.mubr.f32.gmra.mrb[0].mxu0 %v320
      %v434 = vpop.f32.mrb[0].mxu0
      %v435 = vadd.f32 %v301, %v434
      %v436 = vpop.f32.mrb[0].mxu0
      %437 = vmatprep.mubr.f32.mxu0 0.0
      %438 = vmatmul.mubr.f32.gmra.mrb[0].mxu0 %v323
      %v439 = vpop.f32.mrb[0].mxu0
      %v440 = vadd.f32 %v301, %v439
      %v441 = vpop.f32.mrb[0].mxu0
      %442 = vmatprep.mubr.f32.mxu0 0.0
      %443 = vmatmul.mubr.f32.gmra.mrb[0].mxu0 %v326
      %v444 = vpop.f32.mrb[0].mxu0
      %v445 = vadd.f32 %v301, %v444
      %v446 = vpop.f32.mrb[0].mxu0
      %447 = vmatprep.mubr.f32.mxu0 0.0
      %448 = vmatmul.mubr.f32.gmra.mrb[0].mxu0 %v329
      %v449 = vpop.f32.mrb[0].mxu0
      %v450 = vadd.f32 %v301, %v449
      %v451 = vpop.f32.mrb[0].mxu0
      %452 = vmatprep.mubr.f32.mxu0 0.0
      %453 = vmatmul.mubr.f32.gmra.mrb[0].mxu0 %v332
      %v454 = vpop.f32.mrb[0].mxu0
      %v455 = vadd.f32 %v301, %v454
      %v456 = vpop.f32.mrb[0].mxu0
      %457 = vmatprep.mubr.f32.mxu0 0.0
      %458 = vmatmul.mubr.f32.gmra.mrb[0].mxu0 %v335
      %v459 = vpop.f32.mrb[0].mxu0
      %v460 = vadd.f32 %v301, %v459
      %v461 = vpop.f32.mrb[0].mxu0
      %462 = vmatprep.mubr.f32.mxu0 0.0
      %463 = vmatmul.mubr.f32.gmra.mrb[0].mxu0 %v338
      %v464 = vpop.f32.mrb[0].mxu0
      %v465 = vadd.f32 %v301, %v464
      %v466 = vpop.f32.mrb[0].mxu0
      %467 = vmatprep.mubr.f32.mxu0 0.0
      %468 = vmatmul.mubr.f32.gmra.mrb[0].mxu0 %v341
      %v469 = vpop.f32.mrb[0].mxu0
      %v470 = vadd.f32 %v301, %v469
      %v471 = vpop.f32.mrb[0].mxu0
      %472 = vdwg.mxu0
      %v473 = vmax.f32 %v410, 0.0
      %v474 = vmax.f32 %v415, 0.0
      %v475 = vmax.f32 %v420, 0.0
      %v476 = vmax.f32 %v425, 0.0
      %v477 = vmax.f32 %v430, 0.0
      %v478 = vmax.f32 %v435, 0.0
      %v479 = vmax.f32 %v440, 0.0
      %v480 = vmax.f32 %v445, 0.0
      %v481 = vmax.f32 %v450, 0.0
      %v482 = vmax.f32 %v455, 0.0
      %v483 = vmax.f32 %v460, 0.0
      %v484 = vmax.f32 %v465, 0.0
      %v485 = vmax.f32 %v470, 0.0
      %v486 = vld [vmem:[%s3] sm:$0xff]
      %v487 = vld [vmem:[%s3 + $0x8] sm:$0xff]
      %v488 = vld [vmem:[%s3 + $0x10] sm:$0xff]
      %v489 = vld [vmem:[%s3 + $0x18] sm:$0xff]
      %v490 = vld [vmem:[%s4] sm:$0x1]
      %v492 = vlaneseq
      %v493 = vshrl.u32 %v492, 7
      %v494 = vsub.s32 0, %v493
      %v495 = vrot.slane %v490, %v494
      %vm497 = vcmask 261120
      %v499 = vsel %vm497, %v473, 0
      %v502 = vsel %vm497, %v474, 0
      %v505 = vsel %vm497, %v475, 0
      %v508 = vsel %vm497, %v476, 0
      %v511 = vsel %vm497, %v477, 0
      %v514 = vsel %vm497, %v478, 0
      %v517 = vsel %vm497, %v479, 0
      %v520 = vsel %vm497, %v480, 0
      %v523 = vsel %vm497, %v481, 0
      %v526 = vsel %vm497, %v482, 0
      %v529 = vsel %vm497, %v483, 0
      %v532 = vsel %vm497, %v484, 0
      %v535 = vsel %vm497, %v485, 0
      %537 = vmatprep.subr.mxu0 0.0
      %538 = vmatpush1.msra.mxu0 %v486
      %539 = vmatprep.subr.mxu0 0.0
      %540 = vmatpush1.msra.mxu0 %v487
      %541 = vmatprep.subr.mxu0 0.0
      %542 = vmatpush1.msra.mxu0 %v488
      %543 = vmatprep.subr.mxu0 0.0
      %544 = vmatpush1.msra.mxu0 %v489
      %545 = vmatprep.subr.mxu0 0.0
      %546 = vmatpush1.msra.mxu0 0.0
      %547 = vmatprep.subr.mxu0 0.0
      %548 = vmatpush1.msra.mxu0 0.0
      %549 = vmatprep.subr.mxu0 0.0
      %550 = vmatpush1.msra.mxu0 0.0
      %551 = vmatprep.subr.mxu0 0.0
      %552 = vmatpush1.msra.mxu0 0.0
      %553 = vmatprep.subr.mxu0 0.0
      %554 = vmatpush1.msra.mxu0 0.0
      %555 = vmatprep.subr.mxu0 0.0
      %556 = vmatpush1.msra.mxu0 0.0
      %557 = vmatprep.subr.mxu0 0.0
      %558 = vmatpush1.msra.mxu0 0.0
      %559 = vmatprep.subr.mxu0 0.0
      %560 = vmatpush1.msra.mxu0 0.0
      %561 = vmatprep.subr.mxu0 0.0
      %562 = vmatpush1.msra.mxu0 0.0
      %563 = vmatprep.subr.mxu0 0.0
      %564 = vmatpush1.msra.mxu0 0.0
      %565 = vmatprep.subr.mxu0 0.0
      %566 = vmatpush1.msra.mxu0 0.0
      %567 = vmatprep.subr.mxu0 0.0
      %568 = vmatpush1.msra.mxu0 0.0
      %569 = vmatprep.subr.mxu0 0.0
      %570 = vmatpush1.msra.mxu0 0.0
      %571 = vmatprep.subr.mxu0 0.0
      %572 = vmatpush1.msra.mxu0 0.0
      %573 = vmatprep.subr.mxu0 0.0
      %574 = vmatpush1.msra.mxu0 0.0
      %575 = vmatprep.subr.mxu0 0.0
      %576 = vmatpush1.msra.mxu0 0.0
      %577 = vmatprep.subr.mxu0 0.0
      %578 = vmatpush1.msra.mxu0 0.0
      %579 = vmatprep.subr.mxu0 0.0
      %580 = vmatpush1.msra.mxu0 0.0
      %581 = vmatprep.subr.mxu0 0.0
      %582 = vmatpush1.msra.mxu0 0.0
      %583 = vmatprep.subr.mxu0 0.0
      %584 = vmatpush1.msra.mxu0 0.0
      %585 = vmatprep.subr.mxu0 0.0
      %586 = vmatpush1.msra.mxu0 0.0
      %587 = vmatprep.subr.mxu0 0.0
      %588 = vmatpush1.msra.mxu0 0.0
      %589 = vmatprep.subr.mxu0 0.0
      %590 = vmatpush1.msra.mxu0 0.0
      %591 = vmatprep.subr.mxu0 0.0
      %592 = vmatpush1.msra.mxu0 0.0
      %593 = vmatprep.subr.mxu0 0.0
      %594 = vmatpush1.msra.mxu0 0.0
      %595 = vmatprep.subr.mxu0 0.0
      %596 = vmatpush1.msra.mxu0 0.0
      %597 = vmatprep.subr.mxu0 0.0
      %598 = vmatpush1.msra.mxu0 0.0
      %599 = vmatprep.subr.mxu0 0.0
      %600 = vmatpush1.msra.mxu0 0.0
      %601 = vmatprep.mubr.f32.mxu0 0.0
      %602 = vmatmul.mubr.f32.gmra.mrb[0].mxu0 %v499
      %v603 = vpop.f32.mrb[0].mxu0
      %v604 = vadd.f32 %v495, %v603
      %v605 = vpop.f32.mrb[0].mxu0
      %606 = vmatprep.mubr.f32.mxu0 0.0
      %607 = vmatmul.mubr.f32.gmra.mrb[0].mxu0 %v502
      %v608 = vpop.f32.mrb[0].mxu0
      %v609 = vadd.f32 %v495, %v608
      %v610 = vpop.f32.mrb[0].mxu0
      %611 = vmatprep.mubr.f32.mxu0 0.0
      %612 = vmatmul.mubr.f32.gmra.mrb[0].mxu0 %v505
      %v613 = vpop.f32.mrb[0].mxu0
      %v614 = vadd.f32 %v495, %v613
      %v615 = vpop.f32.mrb[0].mxu0
      %616 = vmatprep.mubr.f32.mxu0 0.0
      %617 = vmatmul.mubr.f32.gmra.mrb[0].mxu0 %v508
      %v618 = vpop.f32.mrb[0].mxu0
      %v619 = vadd.f32 %v495, %v618
      %v620 = vpop.f32.mrb[0].mxu0
      %621 = vmatprep.mubr.f32.mxu0 0.0
      %622 = vmatmul.mubr.f32.gmra.mrb[0].mxu0 %v511
      %v623 = vpop.f32.mrb[0].mxu0
      %v624 = vadd.f32 %v495, %v623
      %v625 = vpop.f32.mrb[0].mxu0
      %626 = vmatprep.mubr.f32.mxu0 0.0
      %627 = vmatmul.mubr.f32.gmra.mrb[0].mxu0 %v514
      %v628 = vpop.f32.mrb[0].mxu0
      %v629 = vadd.f32 %v495, %v628
      %v630 = vpop.f32.mrb[0].mxu0
      %631 = vmatprep.mubr.f32.mxu0 0.0
      %632 = vmatmul.mubr.f32.gmra.mrb[0].mxu0 %v517
      %v633 = vpop.f32.mrb[0].mxu0
      %v634 = vadd.f32 %v495, %v633
      %v635 = vpop.f32.mrb[0].mxu0
      %636 = vmatprep.mubr.f32.mxu0 0.0
      %637 = vmatmul.mubr.f32.gmra.mrb[0].mxu0 %v520
      %v638 = vpop.f32.mrb[0].mxu0
      %v639 = vadd.f32 %v495, %v638
      %v640 = vpop.f32.mrb[0].mxu0
      %641 = vmatprep.mubr.f32.mxu0 0.0
      %642 = vmatmul.mubr.f32.gmra.mrb[0].mxu0 %v523
      %v643 = vpop.f32.mrb[0].mxu0
      %v644 = vadd.f32 %v495, %v643
      %v645 = vpop.f32.mrb[0].mxu0
      %646 = vmatprep.mubr.f32.mxu0 0.0
      %647 = vmatmul.mubr.f32.gmra.mrb[0].mxu0 %v526
      %v648 = vpop.f32.mrb[0].mxu0
      %v649 = vadd.f32 %v495, %v648
      %v650 = vpop.f32.mrb[0].mxu0
      %651 = vmatprep.mubr.f32.mxu0 0.0
      %652 = vmatmul.mubr.f32.gmra.mrb[0].mxu0 %v529
      %v653 = vpop.f32.mrb[0].mxu0
      %v654 = vadd.f32 %v495, %v653
      %v655 = vpop.f32.mrb[0].mxu0
      %656 = vmatprep.mubr.f32.mxu0 0.0
      %657 = vmatmul.mubr.f32.gmra.mrb[0].mxu0 %v532
      %v658 = vpop.f32.mrb[0].mxu0
      %v659 = vadd.f32 %v495, %v658
      %v660 = vpop.f32.mrb[0].mxu0
      %661 = vmatprep.mubr.f32.mxu0 0.0
      %662 = vmatmul.mubr.f32.gmra.mrb[0].mxu0 %v535
      %v663 = vpop.f32.mrb[0].mxu0
      %v664 = vadd.f32 %v495, %v663
      %v665 = vpop.f32.mrb[0].mxu0
      %666 = vdwg.mxu0
      %v667 = vmax.f32 %v604, 0.0
      %v668 = vmax.f32 %v609, 0.0
      %v669 = vmax.f32 %v614, 0.0
      %v670 = vmax.f32 %v619, 0.0
      %v671 = vmax.f32 %v624, 0.0
      %v672 = vmax.f32 %v629, 0.0
      %v673 = vmax.f32 %v634, 0.0
      %v674 = vmax.f32 %v639, 0.0
      %v675 = vmax.f32 %v644, 0.0
      %v676 = vmax.f32 %v649, 0.0
      %v677 = vmax.f32 %v654, 0.0
      %v678 = vmax.f32 %v659, 0.0
      %v679 = vmax.f32 %v664, 0.0
      %v680 = vld [vmem:[%s5] sm:$0xff]
      %v681 = vld [vmem:[%s5 + $0x8] sm:$0xff]
      %v682 = vld [vmem:[%s5 + $0x10] sm:$0xff]
      %v683 = vld [vmem:[%s5 + $0x18] sm:$0xff]
      %v685 = vsel %vm497, %v667, 0
      %v688 = vsel %vm497, %v668, 0
      %v691 = vsel %vm497, %v669, 0
      %v694 = vsel %vm497, %v670, 0
      %v697 = vsel %vm497, %v671, 0
      %v700 = vsel %vm497, %v672, 0
      %v703 = vsel %vm497, %v673, 0
      %v706 = vsel %vm497, %v674, 0
      %v709 = vsel %vm497, %v675, 0
      %v712 = vsel %vm497, %v676, 0
      %v715 = vsel %vm497, %v677, 0
      %v718 = vsel %vm497, %v678, 0
      %v721 = vsel %vm497, %v679, 0
      %723 = vmatprep.subr.mxu0 0.0
      %724 = vmatpush1.msra.mxu0 %v680
      %725 = vmatprep.subr.mxu0 0.0
      %726 = vmatpush1.msra.mxu0 %v681
      %727 = vmatprep.subr.mxu0 0.0
      %728 = vmatpush1.msra.mxu0 %v682
      %729 = vmatprep.subr.mxu0 0.0
      %730 = vmatpush1.msra.mxu0 %v683
      %731 = vmatprep.subr.mxu0 0.0
      %732 = vmatpush1.msra.mxu0 0.0
      %733 = vmatprep.subr.mxu0 0.0
      %734 = vmatpush1.msra.mxu0 0.0
      %735 = vmatprep.subr.mxu0 0.0
      %736 = vmatpush1.msra.mxu0 0.0
      %737 = vmatprep.subr.mxu0 0.0
      %738 = vmatpush1.msra.mxu0 0.0
      %739 = vmatprep.subr.mxu0 0.0
      %740 = vmatpush1.msra.mxu0 0.0
      %741 = vmatprep.subr.mxu0 0.0
      %742 = vmatpush1.msra.mxu0 0.0
      %743 = vmatprep.subr.mxu0 0.0
      %744 = vmatpush1.msra.mxu0 0.0
      %745 = vmatprep.subr.mxu0 0.0
      %746 = vmatpush1.msra.mxu0 0.0
      %747 = vmatprep.subr.mxu0 0.0
      %748 = vmatpush1.msra.mxu0 0.0
      %749 = vmatprep.subr.mxu0 0.0
      %750 = vmatpush1.msra.mxu0 0.0
      %751 = vmatprep.subr.mxu0 0.0
      %752 = vmatpush1.msra.mxu0 0.0
      %753 = vmatprep.subr.mxu0 0.0
      %754 = vmatpush1.msra.mxu0 0.0
      %755 = vmatprep.subr.mxu0 0.0
      %756 = vmatpush1.msra.mxu0 0.0
      %757 = vmatprep.subr.mxu0 0.0
      %758 = vmatpush1.msra.mxu0 0.0
      %759 = vmatprep.subr.mxu0 0.0
      %760 = vmatpush1.msra.mxu0 0.0
      %761 = vmatprep.subr.mxu0 0.0
      %762 = vmatpush1.msra.mxu0 0.0
      %763 = vmatprep.subr.mxu0 0.0
      %764 = vmatpush1.msra.mxu0 0.0
      %765 = vmatprep.subr.mxu0 0.0
      %766 = vmatpush1.msra.mxu0 0.0
      %767 = vmatprep.subr.mxu0 0.0
      %768 = vmatpush1.msra.mxu0 0.0
      %769 = vmatprep.subr.mxu0 0.0
      %770 = vmatpush1.msra.mxu0 0.0
      %771 = vmatprep.subr.mxu0 0.0
      %772 = vmatpush1.msra.mxu0 0.0
      %773 = vmatprep.subr.mxu0 0.0
      %774 = vmatpush1.msra.mxu0 0.0
      %775 = vmatprep.subr.mxu0 0.0
      %776 = vmatpush1.msra.mxu0 0.0
      %777 = vmatprep.subr.mxu0 0.0
      %778 = vmatpush1.msra.mxu0 0.0
      %779 = vmatprep.subr.mxu0 0.0
      %780 = vmatpush1.msra.mxu0 0.0
      %781 = vmatprep.subr.mxu0 0.0
      %782 = vmatpush1.msra.mxu0 0.0
      %783 = vmatprep.subr.mxu0 0.0
      %784 = vmatpush1.msra.mxu0 0.0
      %785 = vmatprep.subr.mxu0 0.0
      %786 = vmatpush1.msra.mxu0 0.0
      %787 = vmatprep.mubr.f32.mxu0 0.0
      %788 = vmatmul.mubr.f32.gmra.mrb[0].mxu0 %v685
      %v789 = vpop.f32.mrb[0].mxu0
      %v790 = vadd.f32 0.0, %v789
      %v791 = vpop.f32.mrb[0].mxu0
      %792 = vmatprep.mubr.f32.mxu0 0.0
      %793 = vmatmul.mubr.f32.gmra.mrb[0].mxu0 %v688
      %v794 = vpop.f32.mrb[0].mxu0
      %v795 = vadd.f32 0.0, %v794
      %v796 = vpop.f32.mrb[0].mxu0
      %797 = vmatprep.mubr.f32.mxu0 0.0
      %798 = vmatmul.mubr.f32.gmra.mrb[0].mxu0 %v691
      %v799 = vpop.f32.mrb[0].mxu0
      %v800 = vadd.f32 0.0, %v799
      %v801 = vpop.f32.mrb[0].mxu0
      %802 = vmatprep.mubr.f32.mxu0 0.0
      %803 = vmatmul.mubr.f32.gmra.mrb[0].mxu0 %v694
      %v804 = vpop.f32.mrb[0].mxu0
      %v805 = vadd.f32 0.0, %v804
      %v806 = vpop.f32.mrb[0].mxu0
      %807 = vmatprep.mubr.f32.mxu0 0.0
      %808 = vmatmul.mubr.f32.gmra.mrb[0].mxu0 %v697
      %v809 = vpop.f32.mrb[0].mxu0
      %v810 = vadd.f32 0.0, %v809
      %v811 = vpop.f32.mrb[0].mxu0
      %812 = vmatprep.mubr.f32.mxu0 0.0
      %813 = vmatmul.mubr.f32.gmra.mrb[0].mxu0 %v700
      %v814 = vpop.f32.mrb[0].mxu0
      %v815 = vadd.f32 0.0, %v814
      %v816 = vpop.f32.mrb[0].mxu0
      %817 = vmatprep.mubr.f32.mxu0 0.0
      %818 = vmatmul.mubr.f32.gmra.mrb[0].mxu0 %v703
      %v819 = vpop.f32.mrb[0].mxu0
      %v820 = vadd.f32 0.0, %v819
      %v821 = vpop.f32.mrb[0].mxu0
      %822 = vmatprep.mubr.f32.mxu0 0.0
      %823 = vmatmul.mubr.f32.gmra.mrb[0].mxu0 %v706
      %v824 = vpop.f32.mrb[0].mxu0
      %v825 = vadd.f32 0.0, %v824
      %v826 = vpop.f32.mrb[0].mxu0
      %827 = vmatprep.mubr.f32.mxu0 0.0
      %828 = vmatmul.mubr.f32.gmra.mrb[0].mxu0 %v709
      %v829 = vpop.f32.mrb[0].mxu0
      %v830 = vadd.f32 0.0, %v829
      %v831 = vpop.f32.mrb[0].mxu0
      %832 = vmatprep.mubr.f32.mxu0 0.0
      %833 = vmatmul.mubr.f32.gmra.mrb[0].mxu0 %v712
      %v834 = vpop.f32.mrb[0].mxu0
      %v835 = vadd.f32 0.0, %v834
      %v836 = vpop.f32.mrb[0].mxu0
      %837 = vmatprep.mubr.f32.mxu0 0.0
      %838 = vmatmul.mubr.f32.gmra.mrb[0].mxu0 %v715
      %v839 = vpop.f32.mrb[0].mxu0
      %v840 = vadd.f32 0.0, %v839
      %v841 = vpop.f32.mrb[0].mxu0
      %842 = vmatprep.mubr.f32.mxu0 0.0
      %843 = vmatmul.mubr.f32.gmra.mrb[0].mxu0 %v718
      %v844 = vpop.f32.mrb[0].mxu0
      %v845 = vadd.f32 0.0, %v844
      %v846 = vpop.f32.mrb[0].mxu0
      %847 = vmatprep.mubr.f32.mxu0 0.0
      %848 = vmatmul.mubr.f32.gmra.mrb[0].mxu0 %v721
      %v849 = vpop.f32.mrb[0].mxu0
      %v850 = vadd.f32 0.0, %v849
      %v851 = vpop.f32.mrb[0].mxu0
      %852 = vdwg.mxu0
      %v853 = vtanh.pop %v790
      %v854 = vtanh.pop %v795
      %v855 = vtanh.pop %v800
      %v856 = vtanh.pop %v805
      %v857 = vtanh.pop %v810
      %v858 = vtanh.pop %v815
      %v859 = vtanh.pop %v820
      %v860 = vtanh.pop %v825
      %v861 = vtanh.pop %v830
      %v862 = vtanh.pop %v835
      %v863 = vtanh.pop %v840
      %v864 = vtanh.pop %v845
      %v865 = vtanh.pop %v850
      %v866 = vld [vmem:[%s6] sm:$0x1]
      %v868 = vlaneseq
      %v869 = vshrl.u32 %v868, 7
      %v870 = vsub.s32 0, %v869
      %v871 = vrot.slane %v866, %v870
      %v873 = vmul.f32 %v853, %v871
      %v874 = vmul.f32 %v854, %v871
      %v875 = vmul.f32 %v855, %v871
      %v876 = vmul.f32 %v856, %v871
      %v877 = vmul.f32 %v857, %v871
      %v878 = vmul.f32 %v858, %v871
      %v879 = vmul.f32 %v859, %v871
      %v880 = vmul.f32 %v860, %v871
      %v881 = vmul.f32 %v861, %v871
      %v882 = vmul.f32 %v862, %v871
      %v883 = vmul.f32 %v863, %v871
      %v884 = vmul.f32 %v864, %v871
      %v885 = vmul.f32 %v865, %v871
      %vm886 = vcmask 31744
      %887 = vst.msk [vmem:[%s280] sm:$0xff] %vm886, %v873
      %888 = vst.msk [vmem:[%s280 + $0x8] sm:$0xff] %vm886, %v874
      %889 = vst.msk [vmem:[%s280 + $0x10] sm:$0xff] %vm886, %v875
      %890 = vst.msk [vmem:[%s280 + $0x18] sm:$0xff] %vm886, %v876
      %891 = vst.msk [vmem:[%s280 + $0x20] sm:$0xff] %vm886, %v877
      %892 = vst.msk [vmem:[%s280 + $0x28] sm:$0xff] %vm886, %v878
      %893 = vst.msk [vmem:[%s280 + $0x30] sm:$0xff] %vm886, %v879
      %894 = vst.msk [vmem:[%s280 + $0x38] sm:$0xff] %vm886, %v880
      %895 = vst.msk [vmem:[%s280 + $0x40] sm:$0xff] %vm886, %v881
      %896 = vst.msk [vmem:[%s280 + $0x48] sm:$0xff] %vm886, %v882
      %897 = vst.msk [vmem:[%s280 + $0x50] sm:$0xff] %vm886, %v883
      %898 = vst.msk [vmem:[%s280 + $0x58] sm:$0xff] %vm886, %v884
      %899 = vst.msk [vmem:[%s280 + $0x60] sm:$0xff] %vm886, %v885
      %s900 = smul.u32 13, %s18
      %p901 = scmp.lt.s32.totalorder %s900, 25
      %s902 = scalar_select %p901, %s900, 25
      %s903 = smul.addr %s902, 8
      %s904 = scalar_lea.vmem %s7, %s903
      // Predicated region
      $region49: #{deep_fel_forward.1} parent=47 // pred_check
        %p905 = pneg %p188
      $region50: #{deep_fel_forward.1} parent=47 // pred_check_branch
        %907 = sbr.rel (%p905) target = $region52
      $region51: #{deep_fel_forward.1} parent=47 // pred_region
        %s908 = smul.u32 13, %s18
      $region52: #{deep_fel_forward.1} parent=47 // pred_fallthru
        _
    $region48: #{deep_fel_forward.1} parent=5 // pred_fallthru
      _
    %p909 = scmp.le.s32.totalorder 2, %s13
    // Predicated region
    $region53: #{deep_fel_forward.1} parent=5 // pred_check
      %p910 = pneg %p909
    $region54: #{deep_fel_forward.1} parent=5 // pred_check_branch
      %912 = sbr.rel (%p910) target = $region56
    $region55: #{deep_fel_forward.1} parent=5 // pred_region
      %s913 = ssub.s32 %s13, 2
      // Predicated region
      $region57: #{deep_fel_forward.1} parent=55 // pred_check
        %p914 = pneg %p194
      $region58: #{deep_fel_forward.1} parent=55 // pred_check_branch
        %916 = sbr.rel (%p914) target = $region60
      $region59: #{deep_fel_forward.1} parent=55 // pred_region
        %s917 = smul.u32 13, %s19
        %p918 = scmp.lt.s32.totalorder %s917, 25
        %s919 = scalar_select %p918, %s917, 25
        %s920 = smul.addr %s919, 8
        %s921 = scalar_lea.vmem %s7, %s920
      $region60: #{deep_fel_forward.1} parent=55 // pred_fallthru
        _
    $region56: #{deep_fel_forward.1} parent=5 // pred_fallthru
      _
  $region6: #{deep_fel_forward.1} parent=0 // loop_footer
    %s17 = sadd.s32 1, %s13
  $region7: #{deep_fel_forward.1} parent=0 // loop_footer_branch
    %12 = sbr.rel target = $region3
  $region8: #{deep_fel_forward.1} parent=0 // loop_exit
    _

</llo_original>
